<compile_context>
chip_gen: v5e
topology: v5e:2x2
jax: 0.10.0
libtpu: 0.0.40
codegen_flags: <defaults>
</compile_context>

<pallas_src>
import jax
import jax.numpy as jnp
from jax.experimental import pallas as pl
from jax.experimental.pallas import tpu as pltpu


def _make_kernel(activation):
    """Builds the fused maxpool+BN+activation kernel for a fixed activation."""

    def kernel(patches_ref, scale_ref, bias_ref, out_ref):
        # patches_ref block: (k*k, Bnc, Ho*Wo)   scale/bias: (Bnc, 1) f32
        # out_ref block:     (Bnc, Ho*Wo)
        k2 = patches_ref.shape[0]

        # Unrolled VPU maximums over the k*k window axis on full
        # (Bnc, Ho*Wo) slabs.
        m = patches_ref[0]
        for j in range(1, k2):
            m = jnp.maximum(m, patches_ref[j])
        m = m.astype(jnp.float32)

        if activation == "relu":
            # Module order for relu: MaxPool -> ReLU -> BatchNorm
            m = jnp.maximum(m, 0.0)
            y = m * scale_ref[...] + bias_ref[...]
        else:
            # Default ('htanh'): MaxPool -> BatchNorm -> Hardtanh
            y = m * scale_ref[...] + bias_ref[...]
            y = jnp.clip(y, -1.0, 1.0)

        out_ref[...] = y.astype(out_ref.dtype)

    return kernel


def _pick_plane_block(nc, bytes_per_plane):
    """Largest multiple-of-8 divisor of nc whose double-buffered blocks stay
    within a conservative VMEM budget (fits the default scoped limit on
    v5e/v6e/v7x).  Falls back to a single full block."""
    budget = 12 * 1024 * 1024
    cap = min(nc, 512, max(8, budget // max(int(bytes_per_plane), 1)))
    for b in range(cap, 7, -1):
        if nc % b == 0 and b % 8 == 0:
            return b
    return nc


def maxpool_bn_act(x, gamma, beta, running_mean, running_var,
                   kernel_size=3, stride=None, eps=1e-5,
                   activation="htanh"):
    """x: (N, C, H, W) float.  Returns (N, C, Ho, Wo) in x.dtype."""
    N, C, H, W = x.shape
    k = kernel_size
    s = k if stride is None else stride      # PyTorch: stride=None -> kernel_size
    pad = k // 2
    Ho = (H + 2 * pad - k) // s + 1
    Wo = (W + 2 * pad - k) // s + 1
    NC = N * C
    HW = Ho * Wo
    k2 = k * k

    # ---- glue: window slabs (k*k, N*C, Ho*Wo), one fused XLA pass ----------
    # -inf padding matches PyTorch maxpool padding; pad < k so every window
    # contains at least one real element.
    x2 = x.reshape(NC, H, W)
    xp = jnp.pad(x2, ((0, 0), (pad, pad), (pad, pad)),
                 constant_values=-jnp.inf)
    slabs = []
    for kh in range(k):
        for kw in range(k):
            slabs.append(
                xp[:, kh:kh + s * Ho:s, kw:kw + s * Wo:s].reshape(NC, HW))
    patches = jnp.stack(slabs, axis=0)                        # (k*k, NC, HW)

    # ---- glue: fold eval-mode BatchNorm into per-plane scale / bias columns
    scale_c = (gamma.astype(jnp.float32)
               / jnp.sqrt(running_var.astype(jnp.float32) + eps))        # (C,)
    bias_c = beta.astype(jnp.float32) - running_mean.astype(jnp.float32) * scale_c
    scale = jnp.broadcast_to(scale_c[None, :], (N, C)).reshape(NC, 1)    # (NC,1)
    bias = jnp.broadcast_to(bias_c[None, :], (N, C)).reshape(NC, 1)      # (NC,1)

    itemsize = jnp.dtype(x.dtype).itemsize
    bnc = _pick_plane_block(NC, 2 * (k2 + 1) * HW * itemsize)

    out = pl.pallas_call(
        _make_kernel(activation),
        out_shape=jax.ShapeDtypeStruct((NC, HW), x.dtype),
        grid=(NC // bnc,),
        in_specs=[
            pl.BlockSpec((k2, bnc, HW), lambda i: (0, i, 0)),   # window slabs
            pl.BlockSpec((bnc, 1), lambda i: (i, 0)),           # BN scale
            pl.BlockSpec((bnc, 1), lambda i: (i, 0)),           # BN bias
        ],
        out_specs=pl.BlockSpec((bnc, HW), lambda i: (i, 0)),
        compiler_params=pltpu.CompilerParams(
            dimension_semantics=("parallel",)),
    )(patches, scale, bias)

    return out.reshape(N, C, Ho, Wo)


if __name__ == "__main__":
    key = jax.random.PRNGKey(0)
    kx, kg, kb, km, kv = jax.random.split(key, 5)

    N, C, H, W = 2, 4, 16, 16
    x = jax.random.normal(kx, (N, C, H, W), dtype=jnp.float32)

    # deterministic synthetic BatchNorm parameters (affine=True) + running stats
    gamma = jax.random.uniform(kg, (C,), minval=0.5, maxval=1.5,
                               dtype=jnp.float32)
    beta = 0.1 * jax.random.normal(kb, (C,), dtype=jnp.float32)
    running_mean = 0.1 * jax.random.normal(km, (C,), dtype=jnp.float32)
    running_var = jax.random.uniform(kv, (C,), minval=0.5, maxval=1.5,
                                     dtype=jnp.float32)

    out = maxpool_bn_act(x, gamma, beta, running_mean, running_var)
    out = jax.block_until_ready(out)

    # pure-JAX reference: maxpool (k=3, s=3, p=1) -> BN (eval) -> hardtanh
    pooled = jax.lax.reduce_window(
        x, -jnp.inf, jax.lax.max,
        window_dimensions=(1, 1, 3, 3),
        window_strides=(1, 1, 3, 3),
        padding=[(0, 0), (0, 0), (1, 1), (1, 1)])
    sc = gamma / jnp.sqrt(running_var + 1e-5)
    bi = beta - running_mean * sc
    ref = jnp.clip(pooled * sc[None, :, None, None] + bi[None, :, None, None],
                   -1.0, 1.0)

    assert out.shape == (N, C, 6, 6), out.shape
    assert out.dtype == x.dtype, out.dtype
    assert jnp.allclose(out, ref, atol=1e-5, rtol=1e-5), \
        float(jnp.max(jnp.abs(out - ref)))
    print("KERNEL_OK")
</pallas_src>

<mosaic_0001>
module attributes {stable_mosaic.version = 11 : i64} {
  func.func @kernel(%arg0: i32, %arg1: memref<9x8x36xf32, #tpu.memory_space<vmem>>, %arg2: memref<8x1xf32, #tpu.memory_space<vmem>>, %arg3: memref<8x1xf32, #tpu.memory_space<vmem>>, %arg4: memref<8x36xf32, #tpu.memory_space<vmem>>) attributes {dimension_semantics = [#tpu.dimension_semantics<parallel>], iteration_bounds = array<i64: 1>, scalar_prefetch = 0 : i64, scratch_operands = 0 : i64, tpu.core_type = #tpu.core_type<tc>, window_params = [{transform_indices = @transform_0, window_bounds = array<i64: 9, 8, 36>}, {transform_indices = @transform_1, window_bounds = array<i64: 8, 1>}, {transform_indices = @transform_2, window_bounds = array<i64: 8, 1>}, {transform_indices = @transform_3, window_bounds = array<i64: 8, 36>}]} {
    %c0 = arith.constant 0 : index
    %c0_0 = arith.constant 0 : index
    %c0_1 = arith.constant 0 : index
    %0 = vector.load %arg1[%c0, %c0_0, %c0_1] : memref<9x8x36xf32, #tpu.memory_space<vmem>>, vector<1x8x36xf32>
    %1 = vector.shape_cast %0 : vector<1x8x36xf32> to vector<8x36xf32>
    %c1 = arith.constant 1 : index
    %c0_2 = arith.constant 0 : index
    %c0_3 = arith.constant 0 : index
    %2 = vector.load %arg1[%c1, %c0_2, %c0_3] : memref<9x8x36xf32, #tpu.memory_space<vmem>>, vector<1x8x36xf32>
    %3 = vector.shape_cast %2 : vector<1x8x36xf32> to vector<8x36xf32>
    %4 = arith.maximumf %1, %3 : vector<8x36xf32>
    %c2 = arith.constant 2 : index
    %c0_4 = arith.constant 0 : index
    %c0_5 = arith.constant 0 : index
    %5 = vector.load %arg1[%c2, %c0_4, %c0_5] : memref<9x8x36xf32, #tpu.memory_space<vmem>>, vector<1x8x36xf32>
    %6 = vector.shape_cast %5 : vector<1x8x36xf32> to vector<8x36xf32>
    %7 = arith.maximumf %4, %6 : vector<8x36xf32>
    %c3 = arith.constant 3 : index
    %c0_6 = arith.constant 0 : index
    %c0_7 = arith.constant 0 : index
    %8 = vector.load %arg1[%c3, %c0_6, %c0_7] : memref<9x8x36xf32, #tpu.memory_space<vmem>>, vector<1x8x36xf32>
    %9 = vector.shape_cast %8 : vector<1x8x36xf32> to vector<8x36xf32>
    %10 = arith.maximumf %7, %9 : vector<8x36xf32>
    %c4 = arith.constant 4 : index
    %c0_8 = arith.constant 0 : index
    %c0_9 = arith.constant 0 : index
    %11 = vector.load %arg1[%c4, %c0_8, %c0_9] : memref<9x8x36xf32, #tpu.memory_space<vmem>>, vector<1x8x36xf32>
    %12 = vector.shape_cast %11 : vector<1x8x36xf32> to vector<8x36xf32>
    %13 = arith.maximumf %10, %12 : vector<8x36xf32>
    %c5 = arith.constant 5 : index
    %c0_10 = arith.constant 0 : index
    %c0_11 = arith.constant 0 : index
    %14 = vector.load %arg1[%c5, %c0_10, %c0_11] : memref<9x8x36xf32, #tpu.memory_space<vmem>>, vector<1x8x36xf32>
    %15 = vector.shape_cast %14 : vector<1x8x36xf32> to vector<8x36xf32>
    %16 = arith.maximumf %13, %15 : vector<8x36xf32>
    %c6 = arith.constant 6 : index
    %c0_12 = arith.constant 0 : index
    %c0_13 = arith.constant 0 : index
    %17 = vector.load %arg1[%c6, %c0_12, %c0_13] : memref<9x8x36xf32, #tpu.memory_space<vmem>>, vector<1x8x36xf32>
    %18 = vector.shape_cast %17 : vector<1x8x36xf32> to vector<8x36xf32>
    %19 = arith.maximumf %16, %18 : vector<8x36xf32>
    %c7 = arith.constant 7 : index
    %c0_14 = arith.constant 0 : index
    %c0_15 = arith.constant 0 : index
    %20 = vector.load %arg1[%c7, %c0_14, %c0_15] : memref<9x8x36xf32, #tpu.memory_space<vmem>>, vector<1x8x36xf32>
    %21 = vector.shape_cast %20 : vector<1x8x36xf32> to vector<8x36xf32>
    %22 = arith.maximumf %19, %21 : vector<8x36xf32>
    %c8 = arith.constant 8 : index
    %c0_16 = arith.constant 0 : index
    %c0_17 = arith.constant 0 : index
    %23 = vector.load %arg1[%c8, %c0_16, %c0_17] : memref<9x8x36xf32, #tpu.memory_space<vmem>>, vector<1x8x36xf32>
    %24 = vector.shape_cast %23 : vector<1x8x36xf32> to vector<8x36xf32>
    %25 = arith.maximumf %22, %24 : vector<8x36xf32>
    %c0_18 = arith.constant 0 : index
    %c0_19 = arith.constant 0 : index
    %26 = vector.load %arg2[%c0_18, %c0_19] : memref<8x1xf32, #tpu.memory_space<vmem>>, vector<8x1xf32>
    %27 = vector.broadcast %26 : vector<8x1xf32> to vector<8x36xf32>
    %28 = arith.mulf %25, %27 : vector<8x36xf32>
    %c0_20 = arith.constant 0 : index
    %c0_21 = arith.constant 0 : index
    %29 = vector.load %arg3[%c0_20, %c0_21] : memref<8x1xf32, #tpu.memory_space<vmem>>, vector<8x1xf32>
    %30 = vector.broadcast %29 : vector<8x1xf32> to vector<8x36xf32>
    %31 = arith.addf %28, %30 : vector<8x36xf32>
    %cst = arith.constant -1.000000e+00 : f32
    %cst_22 = arith.constant 1.000000e+00 : f32
    %32 = vector.broadcast %cst : f32 to vector<8x36xf32>
    %33 = arith.maximumf %32, %31 : vector<8x36xf32>
    %34 = vector.broadcast %cst_22 : f32 to vector<8x36xf32>
    %35 = arith.minimumf %34, %33 : vector<8x36xf32>
    %c0_23 = arith.constant 0 : index
    %c0_24 = arith.constant 0 : index
    %36 = vector.load %arg4[%c0_23, %c0_24] : memref<8x36xf32, #tpu.memory_space<vmem>>, vector<8x36xf32>
    tpu.vector_store %arg4[%c0_23, %c0_24], %35 {strides = array<i32>} : memref<8x36xf32, #tpu.memory_space<vmem>>, vector<8x36xf32>,
    return
  }
  func.func @transform_0(%arg0: i32) -> (i32, i32, i32) {
    %c0_i32 = arith.constant 0 : i32
    %c0_i32_0 = arith.constant 0 : i32
    %c0_i32_1 = arith.constant 0 : i32
    return %c0_i32, %arg0, %c0_i32_0 : i32, i32, i32
  }
  func.func @transform_1(%arg0: i32) -> (i32, i32) {
    %c0_i32 = arith.constant 0 : i32
    %c0_i32_0 = arith.constant 0 : i32
    return %arg0, %c0_i32 : i32, i32
  }
  func.func @transform_2(%arg0: i32) -> (i32, i32) {
    %c0_i32 = arith.constant 0 : i32
    %c0_i32_0 = arith.constant 0 : i32
    return %arg0, %c0_i32 : i32, i32
  }
  func.func @transform_3(%arg0: i32) -> (i32, i32) {
    %c0_i32 = arith.constant 0 : i32
    %c0_i32_0 = arith.constant 0 : i32
    return %arg0, %c0_i32 : i32, i32
  }
}

</mosaic_0001>

<llo_original>
// kernel: tpu_custom_call.1
$region0: #{tpu_custom_call.1}
  #allocation0 [shape = 'u32[]', space=smem, size = 0x4, offset = 0x4, fixed_abs, tag = 'smem constant byte address 0x4 - core index']
  #allocation1 [shape = 'u32[72,128]{1,0:T(1,128)}', space=vmem, size = 0x9000, scoped, tag = 'internal scratch']
  %s0 = inlined_call_operand.hbm [shape: f32[9,8,36], index: 0, kind: input, shape index: {}]
  %s1 = inlined_call_operand.vmem [shape: f32[8,1], index: 1, kind: input, shape index: {}]
  %s2 = inlined_call_operand.vmem [shape: f32[8,1], index: 2, kind: input, shape index: {}]
  %s3 = inlined_call_operand.hbm [shape: f32[8,36], index: 3, kind: output, shape index: {}]
  %s4 = sld [smem:[#allocation0]]
  $region26: #{tpu_custom_call.1} parent=0
    _
  %s6 = ssub.s32 1, %s4
  %s7 = scalar_select 0, %s6, %s4
  $region1: #{tpu_custom_call.1} parent=0
    #allocation2 [shape = 'u8[36864]{0}', space=vmem, size = 0x9000, scoped, tag = 'input window, operand 0, single buffered']
    #allocation3 [shape = 's32[1]{0}', space=sflag, size = 0x4, scoped, tag = 'scoped memory for tpu_custom_call.1']
    #allocation4 [shape = 's32[1]{0}', space=sflag, size = 0x4, scoped, tag = 'scoped memory for tpu_custom_call.1']
    #allocation5 [shape = 'u8[4096]{0}', space=vmem, size = 0x1000, scoped, tag = 'output window, operand 0, single buffered']
    %8 = vsyncpa [#allocation3], 0
    %9 = vsyncpa [#allocation4], 0
    // Predicated region
    $region2: #{tpu_custom_call.1} parent=1 // pred_check
      _
    $region3: #{tpu_custom_call.1} parent=1 // pred_check_branch
      %11 = sbr.rel (0) target = $region5
    $region4: #{tpu_custom_call.1} parent=1 // pred_region
      %13 = vsyncadd [#allocation3], 0
      %s14 = sshll.u32 %s0, 4
      %s15 = int_to_ptr.hbm [resolvable:$true] %s14
      %s16 = sshll.u32 [#allocation2], 4
      %s17 = int_to_ptr.vmem [resolvable:$true] %s16
      %22 = dma.hbm_to_vmem [thread:$0]  %s15, 1152, %s17, [#allocation3], 128, 128, 8
    $region5: #{tpu_custom_call.1} parent=1 // pred_fallthru
      _
    // Predicated region
    $region6: #{tpu_custom_call.1} parent=1 // pred_check
      _
    $region7: #{tpu_custom_call.1} parent=1 // pred_check_branch
      %24 = sbr.rel (0) target = $region9
    $region8: #{tpu_custom_call.1} parent=1 // pred_region
      _
    $region9: #{tpu_custom_call.1} parent=1 // pred_fallthru
      _
    // Predicated region
    $region10: #{tpu_custom_call.1} parent=1 // pred_check
      _
    $region11: #{tpu_custom_call.1} parent=1 // pred_check_branch
      %26 = sbr.rel (0) target = $region13
    $region12: #{tpu_custom_call.1} parent=1 // pred_region
      _
    $region13: #{tpu_custom_call.1} parent=1 // pred_fallthru
      _
    // Predicated region
    $region14: #{tpu_custom_call.1} parent=1 // pred_check
      _
    $region15: #{tpu_custom_call.1} parent=1 // pred_check_branch
      %28 = sbr.rel (0) target = $region17
    $region16: #{tpu_custom_call.1} parent=1 // pred_region
      %30 = dma.done [#allocation3], 1152
    $region17: #{tpu_custom_call.1} parent=1 // pred_fallthru
      _
    %v31 = vld [vmem:[#allocation2] sm:$0xff]
    %s32 = scalar_lea.vmem [#allocation2], 8
    %v33 = vld [vmem:[%s32] sm:$0xff]
    %v34 = vmax.f32 %v31, %v33
    %s35 = scalar_lea.vmem [#allocation2], 16
    %v36 = vld [vmem:[%s35] sm:$0xff]
    %v37 = vmax.f32 %v34, %v36
    %s38 = scalar_lea.vmem [#allocation2], 24
    %v39 = vld [vmem:[%s38] sm:$0xff]
    %v40 = vmax.f32 %v37, %v39
    %s41 = scalar_lea.vmem [#allocation2], 32
    %v42 = vld [vmem:[%s41] sm:$0xff]
    %v43 = vmax.f32 %v40, %v42
    %s44 = scalar_lea.vmem [#allocation2], 40
    %v45 = vld [vmem:[%s44] sm:$0xff]
    %v46 = vmax.f32 %v43, %v45
    %s47 = scalar_lea.vmem [#allocation2], 48
    %v48 = vld [vmem:[%s47] sm:$0xff]
    %v49 = vmax.f32 %v46, %v48
    %s50 = scalar_lea.vmem [#allocation2], 56
    %v51 = vld [vmem:[%s50] sm:$0xff]
    %v52 = vmax.f32 %v49, %v51
    %s53 = scalar_lea.vmem [#allocation2], 64
    %v54 = vld [vmem:[%s53] sm:$0xff]
    %v55 = vmax.f32 %v52, %v54
    %v56 = vld [vmem:[%s1] sm:$0xff]
    %58 = vset.pattern.permute.xlu0 0
    %59 = vperm.xlu0 %58, %v56
    %v60 = vpop.permute.xlu0 %59
    %v62 = vmul.f32 %v55, %v60
    %v63 = vld [vmem:[%s2] sm:$0xff]
    %65 = vset.pattern.permute.xlu0 0
    %66 = vperm.xlu0 %65, %v63
    %v67 = vpop.permute.xlu0 %66
    %v69 = vadd.f32 %v62, %v67
    %v70 = vmax.f32 %v69, -1.0
    %v71 = vmin.f32 %v70, 1.0
    %vm72 = vcmask 293888
    %73 = vst.msk [vmem:[#allocation5] sm:$0xff] %vm72, %v71
    // Predicated region
    $region18: #{tpu_custom_call.1} parent=1 // pred_check
      _
    $region19: #{tpu_custom_call.1} parent=1 // pred_check_branch
      %75 = sbr.rel (0) target = $region21
    $region20: #{tpu_custom_call.1} parent=1 // pred_region
      %77 = vsyncadd [#allocation4], 0
      %s79 = sshll.u32 [#allocation5], 4
      %s80 = int_to_ptr.vmem [resolvable:$true] %s79
      %s81 = sshll.u32 %s3, 4
      %s82 = int_to_ptr.hbm [resolvable:$true] %s81
      %84 = dma.vmem_to_hbm [thread:$0]  %s80, 128, %s82, [#allocation4]
    $region21: #{tpu_custom_call.1} parent=1 // pred_fallthru
      _
    // Predicated region
    $region22: #{tpu_custom_call.1} parent=1 // pred_check
      _
    $region23: #{tpu_custom_call.1} parent=1 // pred_check_branch
      %86 = sbr.rel (0) target = $region25
    $region24: #{tpu_custom_call.1} parent=1 // pred_region
      %88 = dma.done [#allocation4], 128
    $region25: #{tpu_custom_call.1} parent=1 // pred_fallthru
      _
    %89 = vsyncpa [#allocation3], 1
    %90 = vsyncpa [#allocation4], 1

</llo_original>
